<compile_context>
chip_gen: v7x
topology: tpu7x:2x2x1
jax: 0.10.0
libtpu: 0.0.40
codegen_flags: <defaults>
</compile_context>

<pallas_src>
import jax
import jax.numpy as jnp
from jax.experimental import pallas as pl
from jax.experimental.pallas import tpu as pltpu

_GELU_C0 = 0.044715
_GELU_C1 = 0.7978845608028654


def conv1x1_gelu_kernel(x_ref, w_ref, b_ref, o_ref):
    # x_ref: (1, C, TS, 128) VMEM   w_ref: (C,) SMEM   b_ref: (1,) SMEM
    # o_ref: (1, TS, 128) VMEM
    C = x_ref.shape[1]
    acc = x_ref[0, 0, :, :] * w_ref[0]
    for c in range(1, C):                     # static unroll: C VPU FMAs
        acc = acc + x_ref[0, c, :, :] * w_ref[c]
    acc = acc + b_ref[0]
    v2 = jnp.maximum(acc, 0.0)                # ReLU
    inner = (v2 + (v2 * v2 * v2) * _GELU_C0) * _GELU_C1
    o_ref[0, :, :] = (v2 * 0.5) * (jnp.tanh(inner) + 1.0)


def model_forward(x, weight, bias):
    """x: (N, C, H, W) f32 NCHW.  weight: (1, C, 1, 1), bias: (1,).
    Returns (N, 1, H+2, W+2)."""
    N, C, H, W = x.shape
    HW = H * W

    # Free contiguous reshape of NCHW; only pad the flat pixel axis if it is
    # not already a multiple of 128 lanes (no-op for these shapes).
    x3 = x.reshape(N, C, HW)
    HWp = ((HW + 127) // 128) * 128
    if HWp != HW:
        x3 = jnp.pad(x3, ((0, 0), (0, 0), (0, HWp - HW)))
    S = HWp // 128
    x4 = x3.reshape(N, C, S, 128)

    # Sublane tile over the pixel axis.  TS=64 -> 256 KiB input block
    # (double-buffered 512 KiB), comfortably inside v5e/v6e/v7x scoped VMEM.
    TS = next((t for t in (64, 32, 16, 8) if S % t == 0), S)

    w1d = weight.reshape(C).astype(jnp.float32)
    b1d = bias.reshape(1).astype(jnp.float32)

    grid = (N, S // TS)
    bytes_accessed = (N * C * HWp + N * HWp + C + 1) * 4
    out_flat = pl.pallas_call(
        conv1x1_gelu_kernel,
        out_shape=jax.ShapeDtypeStruct((N, S, 128), jnp.float32),
        grid=grid,
        in_specs=[
            pl.BlockSpec((1, C, TS, 128), lambda n, p: (n, 0, p, 0)),
            pl.BlockSpec(memory_space=pltpu.MemorySpace.SMEM),
            pl.BlockSpec(memory_space=pltpu.MemorySpace.SMEM),
        ],
        out_specs=pl.BlockSpec((1, TS, 128), lambda n, p: (n, p, 0)),
        compiler_params=pltpu.CompilerParams(
            dimension_semantics=("parallel", "parallel")),
        cost_estimate=pl.CostEstimate(
            flops=N * HWp * (2 * C + 10),
            transcendentals=N * HWp,
            bytes_accessed=bytes_accessed),
    )(x4, w1d, b1d)

    core = out_flat.reshape(N, S * 128)[:, :HW].reshape(N, 1, H, W)

    # padding=1 on a 1x1 conv: border output pixels = act(bias).
    b = b1d[0]
    vb = jnp.maximum(b, 0.0)
    border = (vb * 0.5) * (
        jnp.tanh((vb + (vb * vb * vb) * _GELU_C0) * _GELU_C1) + 1.0)
    out = jnp.full((N, 1, H + 2, W + 2), border, dtype=core.dtype)
    return out.at[:, :, 1:-1, 1:-1].set(core)


def reference_forward(x, weight, bias):
    """Pure-JAX reference (pads the input, like the PyTorch module would)."""
    xp = jnp.pad(x, ((0, 0), (0, 0), (1, 1), (1, 1)))
    v1 = jnp.einsum("nchw,oc->nohw", xp, weight.reshape(1, -1)) \
        + bias.reshape(1, 1, 1, 1)
    v2 = jnp.maximum(v1, 0.0)
    v3 = v2 * 0.5
    v6 = v2 * v2 * v2 * _GELU_C0
    v8 = (v2 + v6) * _GELU_C1
    return v3 * (jnp.tanh(v8) + 1.0)


if __name__ == "__main__":
    key = jax.random.PRNGKey(0)
    kx, kw, kb = jax.random.split(key, 3)

    # Small shapes consistent with the module: NCHW with C=8.
    N, C, H, W = 2, 8, 16, 16
    x = jax.random.normal(kx, (N, C, H, W), dtype=jnp.float32)

    # Deterministic Conv2d-style uniform init.
    fan_in = C * 1 * 1
    bound = 1.0 / (fan_in ** 0.5)
    weight = jax.random.uniform(kw, (1, C, 1, 1), jnp.float32, -bound, bound)
    bias = jax.random.uniform(kb, (1,), jnp.float32, -bound, bound)

    out = model_forward(x, weight, bias)
    jax.block_until_ready(out)

    ref = reference_forward(x, weight, bias)
    assert out.shape == (N, 1, H + 2, W + 2), out.shape
    assert jnp.allclose(out, ref, atol=1e-5, rtol=1e-5), \
        float(jnp.max(jnp.abs(out - ref)))

    print("KERNEL_OK")
</pallas_src>

<mosaic_0001>
module attributes {stable_mosaic.version = 11 : i64} {
  func.func @conv1x1_gelu_kernel(%arg0: i32, %arg1: i32, %arg2: memref<1x8x2x128xf32, #tpu.memory_space<vmem>>, %arg3: memref<8xf32, #tpu.memory_space<smem>>, %arg4: memref<1xf32, #tpu.memory_space<smem>>, %arg5: memref<1x2x128xf32, #tpu.memory_space<vmem>>) attributes {dimension_semantics = [#tpu.dimension_semantics<parallel>, #tpu.dimension_semantics<parallel>], iteration_bounds = array<i64: 2, 1>, scalar_prefetch = 0 : i64, scratch_operands = 0 : i64, tpu.core_type = #tpu.core_type<tc>, window_params = [{transform_indices = @transform_0, window_bounds = array<i64: 1, 8, 2, 128>}, {transform_indices = @transform_1, window_bounds = array<i64: 8>}, {transform_indices = @transform_2, window_bounds = array<i64: 1>}, {transform_indices = @transform_3, window_bounds = array<i64: 1, 2, 128>}]} {
    %c0 = arith.constant 0 : index
    %c0_0 = arith.constant 0 : index
    %c0_1 = arith.constant 0 : index
    %c0_2 = arith.constant 0 : index
    %0 = vector.load %arg2[%c0, %c0_0, %c0_1, %c0_2] : memref<1x8x2x128xf32, #tpu.memory_space<vmem>>, vector<1x1x2x128xf32>
    %1 = vector.shape_cast %0 : vector<1x1x2x128xf32> to vector<2x128xf32>
    %c0_3 = arith.constant 0 : index
    %2 = memref.load %arg3[%c0_3] : memref<8xf32, #tpu.memory_space<smem>>
    %3 = vector.broadcast %2 : f32 to vector<2x128xf32>
    %4 = arith.mulf %1, %3 : vector<2x128xf32>
    %c0_4 = arith.constant 0 : index
    %c1 = arith.constant 1 : index
    %c0_5 = arith.constant 0 : index
    %c0_6 = arith.constant 0 : index
    %5 = vector.load %arg2[%c0_4, %c1, %c0_5, %c0_6] : memref<1x8x2x128xf32, #tpu.memory_space<vmem>>, vector<1x1x2x128xf32>
    %6 = vector.shape_cast %5 : vector<1x1x2x128xf32> to vector<2x128xf32>
    %c1_7 = arith.constant 1 : index
    %7 = memref.load %arg3[%c1_7] : memref<8xf32, #tpu.memory_space<smem>>
    %8 = vector.broadcast %7 : f32 to vector<2x128xf32>
    %9 = arith.mulf %6, %8 : vector<2x128xf32>
    %10 = arith.addf %4, %9 : vector<2x128xf32>
    %c0_8 = arith.constant 0 : index
    %c2 = arith.constant 2 : index
    %c0_9 = arith.constant 0 : index
    %c0_10 = arith.constant 0 : index
    %11 = vector.load %arg2[%c0_8, %c2, %c0_9, %c0_10] : memref<1x8x2x128xf32, #tpu.memory_space<vmem>>, vector<1x1x2x128xf32>
    %12 = vector.shape_cast %11 : vector<1x1x2x128xf32> to vector<2x128xf32>
    %c2_11 = arith.constant 2 : index
    %13 = memref.load %arg3[%c2_11] : memref<8xf32, #tpu.memory_space<smem>>
    %14 = vector.broadcast %13 : f32 to vector<2x128xf32>
    %15 = arith.mulf %12, %14 : vector<2x128xf32>
    %16 = arith.addf %10, %15 : vector<2x128xf32>
    %c0_12 = arith.constant 0 : index
    %c3 = arith.constant 3 : index
    %c0_13 = arith.constant 0 : index
    %c0_14 = arith.constant 0 : index
    %17 = vector.load %arg2[%c0_12, %c3, %c0_13, %c0_14] : memref<1x8x2x128xf32, #tpu.memory_space<vmem>>, vector<1x1x2x128xf32>
    %18 = vector.shape_cast %17 : vector<1x1x2x128xf32> to vector<2x128xf32>
    %c3_15 = arith.constant 3 : index
    %19 = memref.load %arg3[%c3_15] : memref<8xf32, #tpu.memory_space<smem>>
    %20 = vector.broadcast %19 : f32 to vector<2x128xf32>
    %21 = arith.mulf %18, %20 : vector<2x128xf32>
    %22 = arith.addf %16, %21 : vector<2x128xf32>
    %c0_16 = arith.constant 0 : index
    %c4 = arith.constant 4 : index
    %c0_17 = arith.constant 0 : index
    %c0_18 = arith.constant 0 : index
    %23 = vector.load %arg2[%c0_16, %c4, %c0_17, %c0_18] : memref<1x8x2x128xf32, #tpu.memory_space<vmem>>, vector<1x1x2x128xf32>
    %24 = vector.shape_cast %23 : vector<1x1x2x128xf32> to vector<2x128xf32>
    %c4_19 = arith.constant 4 : index
    %25 = memref.load %arg3[%c4_19] : memref<8xf32, #tpu.memory_space<smem>>
    %26 = vector.broadcast %25 : f32 to vector<2x128xf32>
    %27 = arith.mulf %24, %26 : vector<2x128xf32>
    %28 = arith.addf %22, %27 : vector<2x128xf32>
    %c0_20 = arith.constant 0 : index
    %c5 = arith.constant 5 : index
    %c0_21 = arith.constant 0 : index
    %c0_22 = arith.constant 0 : index
    %29 = vector.load %arg2[%c0_20, %c5, %c0_21, %c0_22] : memref<1x8x2x128xf32, #tpu.memory_space<vmem>>, vector<1x1x2x128xf32>
    %30 = vector.shape_cast %29 : vector<1x1x2x128xf32> to vector<2x128xf32>
    %c5_23 = arith.constant 5 : index
    %31 = memref.load %arg3[%c5_23] : memref<8xf32, #tpu.memory_space<smem>>
    %32 = vector.broadcast %31 : f32 to vector<2x128xf32>
    %33 = arith.mulf %30, %32 : vector<2x128xf32>
    %34 = arith.addf %28, %33 : vector<2x128xf32>
    %c0_24 = arith.constant 0 : index
    %c6 = arith.constant 6 : index
    %c0_25 = arith.constant 0 : index
    %c0_26 = arith.constant 0 : index
    %35 = vector.load %arg2[%c0_24, %c6, %c0_25, %c0_26] : memref<1x8x2x128xf32, #tpu.memory_space<vmem>>, vector<1x1x2x128xf32>
    %36 = vector.shape_cast %35 : vector<1x1x2x128xf32> to vector<2x128xf32>
    %c6_27 = arith.constant 6 : index
    %37 = memref.load %arg3[%c6_27] : memref<8xf32, #tpu.memory_space<smem>>
    %38 = vector.broadcast %37 : f32 to vector<2x128xf32>
    %39 = arith.mulf %36, %38 : vector<2x128xf32>
    %40 = arith.addf %34, %39 : vector<2x128xf32>
    %c0_28 = arith.constant 0 : index
    %c7 = arith.constant 7 : index
    %c0_29 = arith.constant 0 : index
    %c0_30 = arith.constant 0 : index
    %41 = vector.load %arg2[%c0_28, %c7, %c0_29, %c0_30] : memref<1x8x2x128xf32, #tpu.memory_space<vmem>>, vector<1x1x2x128xf32>
    %42 = vector.shape_cast %41 : vector<1x1x2x128xf32> to vector<2x128xf32>
    %c7_31 = arith.constant 7 : index
    %43 = memref.load %arg3[%c7_31] : memref<8xf32, #tpu.memory_space<smem>>
    %44 = vector.broadcast %43 : f32 to vector<2x128xf32>
    %45 = arith.mulf %42, %44 : vector<2x128xf32>
    %46 = arith.addf %40, %45 : vector<2x128xf32>
    %c0_32 = arith.constant 0 : index
    %47 = memref.load %arg4[%c0_32] : memref<1xf32, #tpu.memory_space<smem>>
    %48 = vector.broadcast %47 : f32 to vector<2x128xf32>
    %49 = arith.addf %46, %48 : vector<2x128xf32>
    %cst = arith.constant 0.000000e+00 : f32
    %50 = vector.broadcast %cst : f32 to vector<2x128xf32>
    %51 = arith.maximumf %49, %50 : vector<2x128xf32>
    %52 = arith.mulf %51, %51 : vector<2x128xf32>
    %53 = arith.mulf %52, %51 : vector<2x128xf32>
    %cst_33 = arith.constant 4.471500e-02 : f32
    %54 = vector.broadcast %cst_33 : f32 to vector<2x128xf32>
    %55 = arith.mulf %53, %54 : vector<2x128xf32>
    %56 = arith.addf %51, %55 : vector<2x128xf32>
    %cst_34 = arith.constant 0.797884583 : f32
    %57 = vector.broadcast %cst_34 : f32 to vector<2x128xf32>
    %58 = arith.mulf %56, %57 : vector<2x128xf32>
    %cst_35 = arith.constant 5.000000e-01 : f32
    %59 = vector.broadcast %cst_35 : f32 to vector<2x128xf32>
    %60 = arith.mulf %51, %59 : vector<2x128xf32>
    %61 = math.tanh %58 : vector<2x128xf32>
    %cst_36 = arith.constant 1.000000e+00 : f32
    %62 = vector.broadcast %cst_36 : f32 to vector<2x128xf32>
    %63 = arith.addf %61, %62 : vector<2x128xf32>
    %64 = arith.mulf %60, %63 : vector<2x128xf32>
    %c0_37 = arith.constant 0 : index
    %c0_38 = arith.constant 0 : index
    %c0_39 = arith.constant 0 : index
    %65 = vector.load %arg5[%c0_37, %c0_38, %c0_39] : memref<1x2x128xf32, #tpu.memory_space<vmem>>, vector<1x2x128xf32>
    %66 = vector.shape_cast %65 : vector<1x2x128xf32> to vector<2x128xf32>
    %67 = vector.shape_cast %64 : vector<2x128xf32> to vector<1x2x128xf32>
    tpu.vector_store %arg5[%c0_37, %c0_38, %c0_39], %67 {strides = array<i32>} : memref<1x2x128xf32, #tpu.memory_space<vmem>>, vector<1x2x128xf32>,
    return
  }
  func.func @transform_0(%arg0: i32, %arg1: i32) -> (i32, i32, i32, i32) {
    %c0_i32 = arith.constant 0 : i32
    %c0_i32_0 = arith.constant 0 : i32
    %c0_i32_1 = arith.constant 0 : i32
    return %arg0, %c0_i32, %arg1, %c0_i32_0 : i32, i32, i32, i32
  }
  func.func @transform_1(%arg0: i32, %arg1: i32) -> i32 {
    %c0_i32 = arith.constant 0 : i32
    %c0_i32_0 = arith.constant 0 : i32
    return %c0_i32 : i32
  }
  func.func @transform_2(%arg0: i32, %arg1: i32) -> i32 {
    %c0_i32 = arith.constant 0 : i32
    %c0_i32_0 = arith.constant 0 : i32
    return %c0_i32 : i32
  }
  func.func @transform_3(%arg0: i32, %arg1: i32) -> (i32, i32, i32) {
    %c0_i32 = arith.constant 0 : i32
    %c0_i32_0 = arith.constant 0 : i32
    return %arg0, %arg1, %c0_i32 : i32, i32, i32
  }
}

</mosaic_0001>

<llo_original>
// kernel: tpu_custom_call.1
$region0: #{tpu_custom_call.1}
  #allocation0 [shape = 'u32[]', space=smem, size = 0x4, offset = 0x4, fixed_abs, tag = 'smem constant byte address 0x4 - core index']
  #allocation1 [shape = 'u32[144,128]{1,0:T(1,128)}', space=vmem, size = 0x12000, scoped, tag = 'internal scratch']
  #allocation2 [shape = 'f32[1]{0:T(128)S(6)}', space=smem, size = 0x200, scoped, tag = 'scoped memory for tpu_custom_call.1']
  %s0 = inlined_call_operand.hbm [shape: f32[2,8,2,128], index: 0, kind: input, shape index: {}]
  %s1 = inlined_call_operand.vmem [shape: f32[8], index: 1, kind: input, shape index: {}]
  %s2 = inlined_call_operand.<no memory space> [shape: f32[1], index: 2, kind: input, shape index: {}]
  %s3 = inlined_call_operand.hbm [shape: f32[2,2,128], index: 3, kind: output, shape index: {}]
  %s4 = sld [smem:[#allocation0]]
  $region53: #{tpu_custom_call.1} parent=0
    _
  %s6 = ssub.s32 1, %s4
  %s7 = scalar_select 0, %s6, %s4
  %8 = sst [smem:[#allocation2]] %s2
  $region1: #{tpu_custom_call.1} parent=0
    #allocation3 [shape = 'u8[16384]{0}', space=vmem, size = 0x4000, scoped, tag = 'input window, operand 0']
    #allocation4 [shape = 's32[2]{0}', space=sflag, size = 0x8, scoped, tag = 'scoped memory for tpu_custom_call.1']
    #allocation5 [shape = 's32[2]{0}', space=sflag, size = 0x8, scoped, tag = 'scoped memory for tpu_custom_call.1']
    #allocation6 [shape = 's32[2]{0}', space=sflag, size = 0x8, scoped, tag = 'scoped memory for tpu_custom_call.1']
    #allocation7 [shape = 'u8[512]{0}', space=smem, size = 0x200, scoped, tag = 'input window, operand 1, single buffered']
    #allocation8 [shape = 'u8[2048]{0}', space=vmem, size = 0x800, scoped, tag = 'output window, operand 0']
    %9 = vsyncpa [#allocation4], 0
    %s10 = scalar_lea.sflag [#allocation4], 1
    %11 = vsyncpa %s10, 0
    %12 = vsyncpa [#allocation6], 0
    %13 = vsyncpa [#allocation5], 0
    %s14 = scalar_lea.sflag [#allocation5], 1
    %15 = vsyncpa %s14, 0
    loop: start=0, step=1, limit=4
    $region2: #{tpu_custom_call.1} parent=1 // loop_pre_header
      _
    $region3: #{tpu_custom_call.1} parent=1 // loop_header
      %s17 = sphi 0, %s21
      %p18 = scmp.ge.s32.totalorder %s17, 4
      %s24 = sphi 0, %s36
      %s25 = sphi 0, %s32
      %s26 = sphi 0, %s24
      %s27 = sphi 0, %s25
      %s28 = sphi 0, %s26
      %s29 = sphi 0, %s27
      %s41 = sphi 0, %s43
      %s44 = sphi 0, %s41
      %s45 = sphi 0, %s44
      %s61 = sphi 0, %s45
      %s65 = sphi 0, %s65
      %s67 = sphi 0, %s65
      %s68 = sphi 0, %s67
      %s82 = sphi 0, %s68
      %s86 = sphi 0, %s86
      %s88 = sphi 0, %s86
      %s89 = sphi 0, %s88
      %s103 = sphi 0, %s89
      %s111 = sphi 0, %s113
      %s114 = sphi 0, %s111
      %s115 = sphi 0, %s114
      %s131 = sphi 0, %s115
    $region4: #{tpu_custom_call.1} parent=1 // loop_header_branch
      %20 = sbr.rel (%p18) target = $region8
    $region5: #{tpu_custom_call.1} parent=1 // loop_body
      %s22 = ssub.s32 %s17, 1
      %s23 = ssub.s32 %s17, 2
      %s30 = sadd.s32 1, %s25
      %p31 = scmp.ge.s32.totalorder %s30, 1
      %s32 = scalar_select %p31, 0, %s30
      %s33 = sadd.s32 1, %s24
      %s34 = scalar_select %p31, %s33, %s24
      %p35 = scmp.ge.s32.totalorder %s34, 2
      %s36 = scalar_select %p35, 0, %s34
      %s37 = ssub.s32 %s24, %s36
      %s38 = ssub.s32 %s25, %s32
      %s39 = sor.u32 %s37, %s38
      %p40 = scmp.eq.s32.totalorder %s39, 0
      %s42 = sadd.s32 %s41, 1
      %s43 = scalar_select %p40, %s41, %s42
      %p46 = pneg %p40
      %p47 = scmp.eq.s32.totalorder %s17, 1
      %p48 = por %p46, %p47
      %p49 = scmp.ne.s32.totalorder %s41, %s44
      %p50 = scmp.eq.s32.totalorder %s17, 0
      %p51 = por %p49, %p50
      %p52 = scmp.ne.s32.totalorder %s41, %s44
      %p53 = scmp.eq.s32.totalorder %s22, 1
      %p54 = por %p52, %p53
      %p55 = scmp.ne.s32.totalorder %s44, %s45
      %p56 = scmp.eq.s32.totalorder %s22, 0
      %p57 = por %p55, %p56
      %p58 = scmp.ne.s32.totalorder %s44, %s45
      %p59 = scmp.eq.s32.totalorder %s23, 1
      %p60 = por %p58, %p59
      %p62 = scmp.ne.s32.totalorder %s45, %s61
      %p63 = scmp.eq.s32.totalorder %s23, 0
      %p64 = por %p62, %p63
      %s66 = sadd.s32 %s65, 1
      %p69 = scmp.eq.s32.totalorder %s17, 1
      %p70 = scmp.ne.s32.totalorder %s65, %s67
      %p71 = scmp.eq.s32.totalorder %s17, 0
      %p72 = por %p70, %p71
      %p73 = scmp.ne.s32.totalorder %s65, %s67
      %p74 = scmp.eq.s32.totalorder %s22, 1
      %p75 = por %p73, %p74
      %p76 = scmp.ne.s32.totalorder %s67, %s68
      %p77 = scmp.eq.s32.totalorder %s22, 0
      %p78 = por %p76, %p77
      %p79 = scmp.ne.s32.totalorder %s67, %s68
      %p80 = scmp.eq.s32.totalorder %s23, 1
      %p81 = por %p79, %p80
      %p83 = scmp.ne.s32.totalorder %s68, %s82
      %p84 = scmp.eq.s32.totalorder %s23, 0
      %p85 = por %p83, %p84
      %s87 = sadd.s32 %s86, 1
      %p90 = scmp.eq.s32.totalorder %s17, 1
      %p91 = scmp.ne.s32.totalorder %s86, %s88
      %p92 = scmp.eq.s32.totalorder %s17, 0
      %p93 = por %p91, %p92
      %p94 = scmp.ne.s32.totalorder %s86, %s88
      %p95 = scmp.eq.s32.totalorder %s22, 1
      %p96 = por %p94, %p95
      %p97 = scmp.ne.s32.totalorder %s88, %s89
      %p98 = scmp.eq.s32.totalorder %s22, 0
      %p99 = por %p97, %p98
      %p100 = scmp.ne.s32.totalorder %s88, %s89
      %p101 = scmp.eq.s32.totalorder %s23, 1
      %p102 = por %p100, %p101
      %p104 = scmp.ne.s32.totalorder %s89, %s103
      %p105 = scmp.eq.s32.totalorder %s23, 0
      %p106 = por %p104, %p105
      %s107 = ssub.s32 %s24, %s36
      %s108 = ssub.s32 %s25, %s32
      %s109 = sor.u32 %s107, %s108
      %p110 = scmp.eq.s32.totalorder %s109, 0
      %s112 = sadd.s32 %s111, 1
      %s113 = scalar_select %p110, %s111, %s112
      %p116 = pneg %p110
      %p117 = scmp.eq.s32.totalorder %s17, 1
      %p118 = por %p116, %p117
      %p119 = scmp.ne.s32.totalorder %s111, %s114
      %p120 = scmp.eq.s32.totalorder %s17, 0
      %p121 = por %p119, %p120
      %p122 = scmp.ne.s32.totalorder %s111, %s114
      %p123 = scmp.eq.s32.totalorder %s22, 1
      %p124 = por %p122, %p123
      %p125 = scmp.ne.s32.totalorder %s114, %s115
      %p126 = scmp.eq.s32.totalorder %s22, 0
      %p127 = por %p125, %p126
      %p128 = scmp.ne.s32.totalorder %s114, %s115
      %p129 = scmp.eq.s32.totalorder %s23, 1
      %p130 = por %p128, %p129
      %p132 = scmp.ne.s32.totalorder %s115, %s131
      %p133 = scmp.eq.s32.totalorder %s23, 0
      %p134 = por %p132, %p133
      %p135 = scmp.le.s32.totalorder 1, %s17
      %p136 = scmp.lt.s32.totalorder %s17, 3
      %p137 = pnand %p135, %p136
      %p138 = pneg %p137
      // Predicated region
      $region9: #{tpu_custom_call.1} parent=5 // pred_check
        _
      $region10: #{tpu_custom_call.1} parent=5 // pred_check_branch
        %140 = sbr.rel (%p137) target = $region12
      $region11: #{tpu_custom_call.1} parent=5 // pred_region
        %s141 = ssub.s32 %s17, 1
        // Predicated region
        $region13: #{tpu_custom_call.1} parent=11 // pred_check
          %p142 = pneg %p78
        $region14: #{tpu_custom_call.1} parent=11 // pred_check_branch
          %144 = sbr.rel (%p142) target = $region16
        $region15: #{tpu_custom_call.1} parent=11 // pred_region
          %s146 = ssub.s32 16, 16
          %147 = vsyncadd [#allocation6], %s146
          %s149 = sshll.u32 %s1, 4
          %s150 = int_to_ptr.vmem [resolvable:$true] %s149
          %152 = dma.vmem_to_smem %s150, 16, [#allocation7], [#allocation6]
        $region16: #{tpu_custom_call.1} parent=11 // pred_fallthru
          _
        // Predicated region
        $region17: #{tpu_custom_call.1} parent=11 // pred_check
          %p153 = pneg %p99
        $region18: #{tpu_custom_call.1} parent=11 // pred_check_branch
          %155 = sbr.rel (%p153) target = $region20
        $region19: #{tpu_custom_call.1} parent=11 // pred_region
          _
        $region20: #{tpu_custom_call.1} parent=11 // pred_fallthru
          _
      $region12: #{tpu_custom_call.1} parent=5 // pred_fallthru
        _
      %p156 = scmp.lt.s32.totalorder %s17, 2
      // Predicated region
      $region21: #{tpu_custom_call.1} parent=5 // pred_check
        %p157 = pneg %p156
      $region22: #{tpu_custom_call.1} parent=5 // pred_check_branch
        %159 = sbr.rel (%p157) target = $region24
      $region23: #{tpu_custom_call.1} parent=5 // pred_region
        // Predicated region
        $region25: #{tpu_custom_call.1} parent=23 // pred_check
          %p160 = pneg %p51
        $region26: #{tpu_custom_call.1} parent=23 // pred_check_branch
          %162 = sbr.rel (%p160) target = $region28
        $region27: #{tpu_custom_call.1} parent=23 // pred_region
          %s163 = sand.u32 %s41, 1
          %s164 = scalar_lea.sflag [#allocation4], %s163
          %s165 = sand.u32 %s41, 1
          %s166 = smul.addr %s165, 16
          %s167 = scalar_lea.vmem [#allocation3], %s166
          %s169 = ssub.s32 256, 256
          %170 = vsyncadd %s164, %s169
          %s171 = smul.addr %s24, 8
          %s172 = sadd.s32 %s25, %s171
          %s173 = smul.addr %s172, 32
          %s174 = scalar_lea.hbm %s0, %s173
          %s175 = sshll.u32 %s167, 4
          %s176 = int_to_ptr.vmem [resolvable:$true] %s175
          %181 = dma.hbm_to_vmem [thread:$0]  %s174, 256, %s176, %s164, 32, 32, 2
        $region28: #{tpu_custom_call.1} parent=23 // pred_fallthru
          _
      $region24: #{tpu_custom_call.1} parent=5 // pred_fallthru
        _
      %p182 = scmp.le.s32.totalorder 1, %s17
      %p183 = scmp.lt.s32.totalorder %s17, 3
      %p184 = pnand %p182, %p183
      %p185 = pneg %p184
      // Predicated region
      $region29: #{tpu_custom_call.1} parent=5 // pred_check
        _
      $region30: #{tpu_custom_call.1} parent=5 // pred_check_branch
        %187 = sbr.rel (%p184) target = $region32
      $region31: #{tpu_custom_call.1} parent=5 // pred_region
        %s188 = ssub.s32 %s17, 1
        %s189 = sand.u32 %s44, 1
        %s190 = scalar_lea.sflag [#allocation4], %s189
        %s191 = sand.u32 %s44, 1
        %s192 = smul.addr %s191, 16
        %s193 = scalar_lea.vmem [#allocation3], %s192
        // Predicated region
        $region33: #{tpu_custom_call.1} parent=31 // pred_check
          %p194 = pneg %p57
        $region34: #{tpu_custom_call.1} parent=31 // pred_check_branch
          %196 = sbr.rel (%p194) target = $region36
        $region35: #{tpu_custom_call.1} parent=31 // pred_region
          %197 = dma.done %s190, 256
        $region36: #{tpu_custom_call.1} parent=31 // pred_fallthru
          _
        // Predicated region
        $region37: #{tpu_custom_call.1} parent=31 // pred_check
          %p198 = pneg %p78
        $region38: #{tpu_custom_call.1} parent=31 // pred_check_branch
          %200 = sbr.rel (%p198) target = $region40
        $region39: #{tpu_custom_call.1} parent=31 // pred_region
          %201 = dma.done [#allocation6], 16
        $region40: #{tpu_custom_call.1} parent=31 // pred_fallthru
          _
        %202 = sfence
        %s203 = sand.u32 %s44, 1
        %s204 = scalar_lea.sflag [#allocation4], %s203
        %s205 = sand.u32 %s44, 1
        %s206 = smul.addr %s205, 16
        %s207 = scalar_lea.vmem [#allocation3], %s206
        %p208 = pneg %p57
        %p209 = pneg %p54
        %p210 = pneg %p78
        %p211 = pneg %p75
        %p212 = pneg %p99
        %p213 = pneg %p96
        %p214 = pneg %p127
        %p215 = pneg %p124
        %s216 = sand.u32 %s114, 1
        %s217 = scalar_lea.sflag [#allocation5], %s216
        %s218 = sand.u32 %s114, 1
        %s219 = smul.addr %s218, 2
        %s220 = scalar_lea.vmem [#allocation8], %s219
        %v221 = vld [vmem:[%s193] sm:$0x3]
        %s222 = sld [smem:[#allocation7]]
        %v223 = vstv %s222
        %v224 = vmul.f32 %v221, %v223
        %s225 = scalar_lea.vmem %s193, 2 [#allocation3]
        %v226 = vld [vmem:[%s225] sm:$0x3]
        %s227 = sld [smem:[#allocation7 + $0x1]]
        %v228 = vstv %s227
        %v229 = vmul.f32 %v226, %v228
        %v230 = vadd.f32 %v224, %v229
        %s231 = scalar_lea.vmem %s193, 4 [#allocation3]
        %v232 = vld [vmem:[%s231] sm:$0x3]
        %s233 = sld [smem:[#allocation7 + $0x2]]
        %v234 = vstv %s233
        %v235 = vmul.f32 %v232, %v234
        %v236 = vadd.f32 %v230, %v235
        %s237 = scalar_lea.vmem %s193, 6 [#allocation3]
        %v238 = vld [vmem:[%s237] sm:$0x3]
        %s239 = sld [smem:[#allocation7 + $0x3]]
        %v240 = vstv %s239
        %v241 = vmul.f32 %v238, %v240
        %v242 = vadd.f32 %v236, %v241
        %s243 = scalar_lea.vmem %s193, 8 [#allocation3]
        %v244 = vld [vmem:[%s243] sm:$0x3]
        %s245 = sld [smem:[#allocation7 + $0x4]]
        %v246 = vstv %s245
        %v247 = vmul.f32 %v244, %v246
        %v248 = vadd.f32 %v242, %v247
        %s249 = scalar_lea.vmem %s193, 10 [#allocation3]
        %v250 = vld [vmem:[%s249] sm:$0x3]
        %s251 = sld [smem:[#allocation7 + $0x5]]
        %v252 = vstv %s251
        %v253 = vmul.f32 %v250, %v252
        %v254 = vadd.f32 %v248, %v253
        %s255 = scalar_lea.vmem %s193, 12 [#allocation3]
        %v256 = vld [vmem:[%s255] sm:$0x3]
        %s257 = sld [smem:[#allocation7 + $0x6]]
        %v258 = vstv %s257
        %v259 = vmul.f32 %v256, %v258
        %v260 = vadd.f32 %v254, %v259
        %s261 = scalar_lea.vmem %s193, 14 [#allocation3]
        %v262 = vld [vmem:[%s261] sm:$0x3]
        %s263 = sld [smem:[#allocation7 + $0x7]]
        %v264 = vstv %s263
        %v265 = vmul.f32 %v262, %v264
        %v266 = vadd.f32 %v260, %v265
        %s267 = sld [smem:[#allocation2]]
        %v268 = vstv %s267
        %v269 = vadd.f32 %v266, %v268
        %v270 = vmax.f32 %v269, 0.0
        %v271 = vmul.f32 %v270, %v270
        %v272 = vmul.f32 %v271, %v270
        %v273 = vmul.f32 %v272, 0.044715
        %v274 = vadd.f32 %v270, %v273
        %v275 = vmul.f32 %v274, 0.7978846
        %v276 = vmul.f32 %v270, 0.5
        %v277 = vtanh.pop %v275
        %v278 = vadd.f32 %v277, 1.0
        %v279 = vmul.f32 %v276, %v278
        %280 = vst [vmem:[%s220] sm:$0x3] %v279
        %s281 = sand.u32 %s114, 1
        %s282 = scalar_lea.sflag [#allocation5], %s281
        %s283 = sand.u32 %s114, 1
        %s284 = smul.addr %s283, 2
        %s285 = scalar_lea.vmem [#allocation8], %s284
        // Predicated region
        $region41: #{tpu_custom_call.1} parent=31 // pred_check
          %p286 = pneg %p124
        $region42: #{tpu_custom_call.1} parent=31 // pred_check_branch
          %288 = sbr.rel (%p286) target = $region44
        $region43: #{tpu_custom_call.1} parent=31 // pred_region
          %s290 = ssub.s32 32, 32
          %291 = vsyncadd %s282, %s290
          %s292 = sadd.s32 %s27, %s26
          %s293 = smul.addr %s292, 32
          %s294 = scalar_lea.hbm %s3, %s293
          %s296 = sshll.u32 %s285, 4
          %s297 = int_to_ptr.vmem [resolvable:$true] %s296
          %299 = dma.vmem_to_hbm [thread:$0]  %s297, 32, %s294, %s282
        $region44: #{tpu_custom_call.1} parent=31 // pred_fallthru
          _
      $region32: #{tpu_custom_call.1} parent=5 // pred_fallthru
        _
      %p300 = scmp.le.s32.totalorder 2, %s17
      // Predicated region
      $region45: #{tpu_custom_call.1} parent=5 // pred_check
        %p301 = pneg %p300
      $region46: #{tpu_custom_call.1} parent=5 // pred_check_branch
        %303 = sbr.rel (%p301) target = $region48
      $region47: #{tpu_custom_call.1} parent=5 // pred_region
        %s304 = ssub.s32 %s17, 2
        // Predicated region
        $region49: #{tpu_custom_call.1} parent=47 // pred_check
          %p305 = pneg %p130
        $region50: #{tpu_custom_call.1} parent=47 // pred_check_branch
          %307 = sbr.rel (%p305) target = $region52
        $region51: #{tpu_custom_call.1} parent=47 // pred_region
          %s308 = sand.u32 %s115, 1
          %s309 = scalar_lea.sflag [#allocation5], %s308
          %s310 = sand.u32 %s115, 1
          %s311 = smul.addr %s310, 2
          %s312 = scalar_lea.vmem [#allocation8], %s311
          %313 = dma.done %s309, 32
        $region52: #{tpu_custom_call.1} parent=47 // pred_fallthru
          _
      $region48: #{tpu_custom_call.1} parent=5 // pred_fallthru
        _
    $region6: #{tpu_custom_call.1} parent=1 // loop_footer
      %s21 = sadd.s32 1, %s17
    $region7: #{tpu_custom_call.1} parent=1 // loop_footer_branch
      %16 = sbr.rel target = $region3
    $region8: #{tpu_custom_call.1} parent=1 // loop_exit
      _
    %314 = vsyncpa [#allocation4], 1
    %s315 = scalar_lea.sflag [#allocation4], 1
    %316 = vsyncpa %s315, 1
    %317 = vsyncpa [#allocation5], 1
    %s318 = scalar_lea.sflag [#allocation5], 1
    %319 = vsyncpa %s318, 1
    %320 = vsyncpa [#allocation6], 1
    %s321 = scalar_lea.sflag [#allocation6], 1
    %322 = vsyncpa %s321, 1

</llo_original>
